<compile_context>
chip_gen: v7x
topology: tpu7x:2x2x1
jax: 0.10.0
libtpu: 0.0.40
codegen_flags: <defaults>
</compile_context>

<pallas_src>
import functools

import jax
import jax.numpy as jnp
from jax.experimental import pallas as pl
from jax.experimental.pallas import tpu as pltpu


def _round_up(a, m):
    return ((a + m - 1) // m) * m


def _pick_divisor_tile(total, cap):
    """Largest multiple of 128 that divides `total` (itself a multiple of 128) and is <= cap."""
    if total <= cap:
        return total
    t = (cap // 128) * 128
    while t >= 128:
        if total % t == 0:
            return t
        t -= 128
    return 128


# ----------------------------- kernels ---------------------------------------


def _matmul_resident_kernel(x_ref, wt_ref, o_ref):
    # Whole (padded) weight resident in VMEM; one MXU call per row tile.
    o_ref[...] = jnp.dot(
        x_ref[...], wt_ref[...], preferred_element_type=jnp.float32
    ).astype(o_ref.dtype)


def _matmul_acc_out_kernel(x_ref, wt_ref, o_ref):
    # f32 output block is VMEM-resident across the K axis -> accumulate in place.
    @pl.when(pl.program_id(2) == 0)
    def _init():
        o_ref[...] = jnp.zeros_like(o_ref)

    o_ref[...] += jnp.dot(x_ref[...], wt_ref[...], preferred_element_type=jnp.float32)


def _matmul_acc_scratch_kernel(x_ref, wt_ref, o_ref, acc_ref):
    # Non-f32 output: accumulate in an f32 scratch, cast on the last K step.
    @pl.when(pl.program_id(2) == 0)
    def _init():
        acc_ref[...] = jnp.zeros_like(acc_ref)

    acc_ref[...] += jnp.dot(x_ref[...], wt_ref[...], preferred_element_type=jnp.float32)

    @pl.when(pl.program_id(2) == pl.num_programs(2) - 1)
    def _finalize():
        o_ref[...] = acc_ref[...].astype(o_ref.dtype)


# ----------------------------- wrapper ----------------------------------------


@functools.partial(
    jax.jit, static_argnames=("out_features", "tm", "tn", "tk", "out_dtype")
)
def linear_forward_pretransposed(
    x, wt, *, out_features, tm=512, tn=512, tk=1024, out_dtype=None
):
    """Compute x @ W.T given the pre-transposed / pre-padded weight.

    x:  [N, K]          activations (any float dtype)
    wt: [Kp, Op]        W.T, already padded to multiples of 128 and cast to the
                        compute dtype (bf16 by default) in LinearPallas.__init__.
    Returns [N, out_features] in `out_dtype` (defaults to x.dtype).
    """
    N, K = x.shape
    Kp, Op = wt.shape
    out_dtype = x.dtype if out_dtype is None else out_dtype
    compute_dtype = wt.dtype

    # --- small-problem fast path: Pallas call + padding overhead would dominate.
    if N * K * Op < (1 << 21):
        y = jnp.dot(
            x.astype(compute_dtype), wt[:K, :], preferred_element_type=jnp.float32
        )
        return y[:, :out_features].astype(out_dtype)

    # Cast activations to the MXU-native compute dtype (bf16: half the DMA bytes).
    x = x.astype(compute_dtype)

    # Pad rows to a whole number of tm tiles, K up to the weight's padded K.
    tm = min(tm, _round_up(N, 128))
    Np = _round_up(N, tm)
    if (Np, Kp) != (N, K):
        x = jnp.pad(x, ((0, Np - N), (0, Kp - K)))

    in_bytes = jnp.dtype(compute_dtype).itemsize
    out_bytes = jnp.dtype(out_dtype).itemsize
    w_bytes = Kp * Op * in_bytes

    # --- weight-resident fast path: whole weight stays in VMEM, no K grid axis.
    resident_vmem = 2 * (tm * Kp * in_bytes + w_bytes + tm * Op * out_bytes)
    if resident_vmem <= 24 * 1024 * 1024:
        grid = (Np // tm,)
        cost = pl.CostEstimate(
            flops=2 * Np * Kp * Op,
            transcendentals=0,
            bytes_accessed=int(Np * Kp * in_bytes + w_bytes + Np * Op * out_bytes),
        )
        out = pl.pallas_call(
            _matmul_resident_kernel,
            out_shape=jax.ShapeDtypeStruct((Np, Op), out_dtype),
            grid_spec=pltpu.PrefetchScalarGridSpec(
                num_scalar_prefetch=0,
                grid=grid,
                in_specs=[
                    pl.BlockSpec((tm, Kp), lambda i: (i, 0)),
                    pl.BlockSpec((Kp, Op), lambda i: (0, 0)),
                ],
                out_specs=pl.BlockSpec((tm, Op), lambda i: (i, 0)),
            ),
            compiler_params=pltpu.CompilerParams(
                dimension_semantics=("parallel",),
                vmem_limit_bytes=48 * 1024 * 1024,
            ),
            cost_estimate=cost,
        )(x, wt)
        return out[:N, :out_features]

    # --- general tiled path: grid = (N/tm, O/tn, K/tk), K innermost ("arbitrary").
    tn = _pick_divisor_tile(Op, tn)
    tk = _pick_divisor_tile(Kp, tk)
    grid = (Np // tm, Op // tn, Kp // tk)

    cost = pl.CostEstimate(
        flops=2 * Np * Kp * Op,
        transcendentals=0,
        bytes_accessed=int(
            Np * Kp * in_bytes * (Op // tn)  # x re-read per output-column sweep
            + w_bytes * (Np // tm)           # W re-read per row-tile sweep
            + Np * Op * out_bytes            # output written once
        ),
    )

    if jnp.dtype(out_dtype) == jnp.dtype(jnp.float32):
        kernel = _matmul_acc_out_kernel
        scratch = []
    else:
        kernel = _matmul_acc_scratch_kernel
        scratch = [pltpu.VMEM((tm, tn), jnp.float32)]

    out = pl.pallas_call(
        kernel,
        out_shape=jax.ShapeDtypeStruct((Np, Op), out_dtype),
        grid_spec=pltpu.PrefetchScalarGridSpec(
            num_scalar_prefetch=0,
            grid=grid,
            in_specs=[
                pl.BlockSpec((tm, tk), lambda i, j, k: (i, k)),
                pl.BlockSpec((tk, tn), lambda i, j, k: (k, j)),
            ],
            out_specs=pl.BlockSpec((tm, tn), lambda i, j, k: (i, j)),
            scratch_shapes=scratch,
        ),
        compiler_params=pltpu.CompilerParams(
            dimension_semantics=("parallel", "parallel", "arbitrary"),
            vmem_limit_bytes=48 * 1024 * 1024,
        ),
        cost_estimate=cost,
    )(x, wt)
    return out[:N, :out_features]


class LinearPallas:
    """Mirror of the PyTorch `Linear` module (single bias-free nn.Linear)."""

    def __init__(self, in_size, out_size, key, compute_dtype=jnp.bfloat16):
        # Kaiming-uniform-ish bound like PyTorch's default nn.Linear init.
        bound = 1.0 / (in_size ** 0.5)
        self.weight = jax.random.uniform(
            key, (out_size, in_size), dtype=jnp.float32, minval=-bound, maxval=bound
        )
        self.in_size = in_size
        self.out_size = out_size

        # Hoisted out of the per-call path: transpose + pad + cast ONCE.
        kp = _round_up(in_size, 128)
        op = _round_up(out_size, 128)
        wt = jnp.swapaxes(self.weight, 0, 1).astype(compute_dtype)
        if (kp, op) != (in_size, out_size):
            wt = jnp.pad(wt, ((0, kp - in_size), (0, op - out_size)))
        self.wt = wt

    def __call__(self, g, x):
        # `g` (graph handle in the original DGL-style code) is unused.
        h = x
        return linear_forward_pretransposed(
            h, self.wt, out_features=self.out_size, out_dtype=jnp.float32
        )


if __name__ == "__main__":
    key = jax.random.PRNGKey(0)
    k_w, k_x = jax.random.split(key)

    # Small but kernel-exercising shapes (128-aligned so the Pallas path engages).
    in_size, out_size, n_nodes = 128, 256, 256

    model = LinearPallas(in_size, out_size, k_w)
    x = jax.random.normal(k_x, (n_nodes, in_size), dtype=jnp.float32)
    g = None  # graph argument is ignored by the forward pass

    out = model(g, x)
    out = jax.block_until_ready(out)

    assert out.shape == (n_nodes, out_size)
    assert out.dtype == jnp.float32

    # Reference with matching numerics (bf16 operands, f32 accumulation).
    ref_bf16 = jnp.dot(
        x.astype(jnp.bfloat16),
        model.weight.T.astype(jnp.bfloat16),
        preferred_element_type=jnp.float32,
    )
    assert jnp.allclose(out, ref_bf16, atol=1e-3, rtol=1e-3)

    # Loose check against the exact f32 reference (only bf16 operand rounding differs).
    ref_f32 = x @ model.weight.T
    assert jnp.allclose(out, ref_f32, atol=5e-2, rtol=5e-2)

    print("KERNEL_OK")
</pallas_src>

<mosaic_0001>
module attributes {stable_mosaic.version = 11 : i64} {
  func.func @_matmul_resident_kernel(%arg0: i32, %arg1: memref<256x128xbf16, #tpu.memory_space<vmem>>, %arg2: memref<128x256xbf16, #tpu.memory_space<vmem>>, %arg3: memref<256x256xf32, #tpu.memory_space<vmem>>) attributes {dimension_semantics = [#tpu.dimension_semantics<parallel>], iteration_bounds = array<i64: 1>, scalar_prefetch = 0 : i64, scratch_operands = 0 : i64, tpu.core_type = #tpu.core_type<tc>, window_params = [{transform_indices = @transform_0, window_bounds = array<i64: 256, 128>}, {pipeline_mode = #tpu.pipeline_mode<synchronous>, transform_indices = @transform_1, window_bounds = array<i64: 128, 256>}, {transform_indices = @transform_2, window_bounds = array<i64: 256, 256>}]} {
    %c0 = arith.constant 0 : index
    %c0_0 = arith.constant 0 : index
    %0 = vector.load %arg1[%c0, %c0_0] : memref<256x128xbf16, #tpu.memory_space<vmem>>, vector<256x128xbf16>
    %c0_1 = arith.constant 0 : index
    %c0_2 = arith.constant 0 : index
    %1 = vector.load %arg2[%c0_1, %c0_2] : memref<128x256xbf16, #tpu.memory_space<vmem>>, vector<128x256xbf16>
    %cst = arith.constant dense<0.000000e+00> : vector<256x256xf32>
    %2 = tpu.matmul %0, %1, %cst {dimension_numbers = #tpu.dot_dimension_numbers<[1], [0], [0], [1], [0, 0, 1, 1], [], []>} : vector<256x128xbf16>, vector<128x256xbf16>, vector<256x256xf32> -> vector<256x256xf32>
    %c0_3 = arith.constant 0 : index
    %c0_4 = arith.constant 0 : index
    %3 = vector.load %arg3[%c0_3, %c0_4] : memref<256x256xf32, #tpu.memory_space<vmem>>, vector<256x256xf32>
    tpu.vector_store %arg3[%c0_3, %c0_4], %2 {strides = array<i32>} : memref<256x256xf32, #tpu.memory_space<vmem>>, vector<256x256xf32>,
    return
  }
  func.func @transform_0(%arg0: i32) -> (i32, i32) {
    %c0_i32 = arith.constant 0 : i32
    %c0_i32_0 = arith.constant 0 : i32
    return %arg0, %c0_i32 : i32, i32
  }
  func.func @transform_1(%arg0: i32) -> (i32, i32) {
    %c0_i32 = arith.constant 0 : i32
    %c0_i32_0 = arith.constant 0 : i32
    %c0_i32_1 = arith.constant 0 : i32
    return %c0_i32, %c0_i32_0 : i32, i32
  }
  func.func @transform_2(%arg0: i32) -> (i32, i32) {
    %c0_i32 = arith.constant 0 : i32
    %c0_i32_0 = arith.constant 0 : i32
    return %arg0, %c0_i32 : i32, i32
  }
}

</mosaic_0001>

<llo_original>
// kernel: linear_forward_pretransposed.1
$region0: #{linear_forward_pretransposed.1}
  #allocation0 [shape = 'u32[]', space=smem, size = 0x4, offset = 0x4, fixed_abs, tag = 'smem constant byte address 0x4 - core index']
  #allocation1 [shape = 'u32[144,128]{1,0:T(1,128)}', space=vmem, size = 0x12000, scoped, tag = 'internal scratch']
  %s0 = inlined_call_operand.vmem [shape: bf16[256,128], index: 0, kind: input, shape index: {}]
  %s1 = inlined_call_operand.vmem [shape: bf16[128,256], index: 1, kind: input, shape index: {}]
  %s2 = inlined_call_operand.hbm [shape: f32[256,256], index: 2, kind: output, shape index: {}]
  %s3 = sld [smem:[#allocation0]]
  $region18: #{linear_forward_pretransposed.1} parent=0
    _
  %s5 = ssub.s32 1, %s3
  %s6 = scalar_select 0, %s5, %s3
  $region1: #{linear_forward_pretransposed.1} parent=0
    #allocation2 [shape = 'u8[262144]{0}', space=vmem, size = 0x40000, scoped, tag = 'output window, operand 0, single buffered']
    #allocation3 [shape = 's32[1]{0}', space=sflag, size = 0x4, scoped, tag = 'scoped memory for linear_forward_pretransposed.1']
    %7 = vsyncpa [#allocation3], 0
    // Predicated region
    $region2: #{linear_forward_pretransposed.1} parent=1 // pred_check
      _
    $region3: #{linear_forward_pretransposed.1} parent=1 // pred_check_branch
      %9 = sbr.rel (0) target = $region5
    $region4: #{linear_forward_pretransposed.1} parent=1 // pred_region
      _
    $region5: #{linear_forward_pretransposed.1} parent=1 // pred_fallthru
      _
    // Predicated region
    $region6: #{linear_forward_pretransposed.1} parent=1 // pred_check
      _
    $region7: #{linear_forward_pretransposed.1} parent=1 // pred_check_branch
      %11 = sbr.rel (0) target = $region9
    $region8: #{linear_forward_pretransposed.1} parent=1 // pred_region
      _
    $region9: #{linear_forward_pretransposed.1} parent=1 // pred_fallthru
      _
    %v13 = vld [vmem:[%s0] sm:$0xf]
    %v14 = vld [vmem:[%s0 + $0x4] sm:$0xf]
    %v15 = vld [vmem:[%s0 + $0x8] sm:$0xf]
    %v16 = vld [vmem:[%s0 + $0xc] sm:$0xf]
    %v17 = vld [vmem:[%s0 + $0x10] sm:$0xf]
    %v18 = vld [vmem:[%s0 + $0x14] sm:$0xf]
    %v19 = vld [vmem:[%s0 + $0x18] sm:$0xf]
    %v20 = vld [vmem:[%s0 + $0x1c] sm:$0xf]
    %v21 = vld [vmem:[%s0 + $0x20] sm:$0xf]
    %v22 = vld [vmem:[%s0 + $0x24] sm:$0xf]
    %v23 = vld [vmem:[%s0 + $0x28] sm:$0xf]
    %v24 = vld [vmem:[%s0 + $0x2c] sm:$0xf]
    %v25 = vld [vmem:[%s0 + $0x30] sm:$0xf]
    %v26 = vld [vmem:[%s0 + $0x34] sm:$0xf]
    %v27 = vld [vmem:[%s0 + $0x38] sm:$0xf]
    %v28 = vld [vmem:[%s0 + $0x3c] sm:$0xf]
    %v29 = vld [vmem:[%s0 + $0x40] sm:$0xf]
    %v30 = vld [vmem:[%s0 + $0x44] sm:$0xf]
    %v31 = vld [vmem:[%s0 + $0x48] sm:$0xf]
    %v32 = vld [vmem:[%s0 + $0x4c] sm:$0xf]
    %v33 = vld [vmem:[%s0 + $0x50] sm:$0xf]
    %v34 = vld [vmem:[%s0 + $0x54] sm:$0xf]
    %v35 = vld [vmem:[%s0 + $0x58] sm:$0xf]
    %v36 = vld [vmem:[%s0 + $0x5c] sm:$0xf]
    %v37 = vld [vmem:[%s0 + $0x60] sm:$0xf]
    %v38 = vld [vmem:[%s0 + $0x64] sm:$0xf]
    %v39 = vld [vmem:[%s0 + $0x68] sm:$0xf]
    %v40 = vld [vmem:[%s0 + $0x6c] sm:$0xf]
    %v41 = vld [vmem:[%s0 + $0x70] sm:$0xf]
    %v42 = vld [vmem:[%s0 + $0x74] sm:$0xf]
    %v43 = vld [vmem:[%s0 + $0x78] sm:$0xf]
    %v44 = vld [vmem:[%s0 + $0x7c] sm:$0xf]
    %v45 = vld [vmem:[%s1] sm:$0xff]
    %v46 = vld [vmem:[%s1 + $0x8] sm:$0xff]
    %v47 = vld [vmem:[%s1 + $0x10] sm:$0xff]
    %v48 = vld [vmem:[%s1 + $0x18] sm:$0xff]
    %v49 = vld [vmem:[%s1 + $0x20] sm:$0xff]
    %v50 = vld [vmem:[%s1 + $0x28] sm:$0xff]
    %v51 = vld [vmem:[%s1 + $0x30] sm:$0xff]
    %v52 = vld [vmem:[%s1 + $0x38] sm:$0xff]
    %v53 = vld [vmem:[%s1 + $0x40] sm:$0xff]
    %v54 = vld [vmem:[%s1 + $0x48] sm:$0xff]
    %v55 = vld [vmem:[%s1 + $0x50] sm:$0xff]
    %v56 = vld [vmem:[%s1 + $0x58] sm:$0xff]
    %v57 = vld [vmem:[%s1 + $0x60] sm:$0xff]
    %v58 = vld [vmem:[%s1 + $0x68] sm:$0xff]
    %v59 = vld [vmem:[%s1 + $0x70] sm:$0xff]
    %v60 = vld [vmem:[%s1 + $0x78] sm:$0xff]
    %v93 = vunpack.c.l.b16 %v13
    %v94 = vunpack.c.l.b16 %v14
    %v95 = vunpack.c.l.b16 %v15
    %v96 = vunpack.c.l.b16 %v16
    %v97 = vunpack.c.l.b16 %v17
    %v98 = vunpack.c.l.b16 %v18
    %v99 = vunpack.c.l.b16 %v19
    %v100 = vunpack.c.l.b16 %v20
    %v101 = vunpack.c.l.b16 %v21
    %v102 = vunpack.c.l.b16 %v22
    %v103 = vunpack.c.l.b16 %v23
    %v104 = vunpack.c.l.b16 %v24
    %v105 = vunpack.c.l.b16 %v25
    %v106 = vunpack.c.l.b16 %v26
    %v107 = vunpack.c.l.b16 %v27
    %v108 = vunpack.c.l.b16 %v28
    %v109 = vunpack.c.l.b16 %v29
    %v110 = vunpack.c.l.b16 %v30
    %v111 = vunpack.c.l.b16 %v31
    %v112 = vunpack.c.l.b16 %v32
    %v113 = vunpack.c.l.b16 %v33
    %v114 = vunpack.c.l.b16 %v34
    %v115 = vunpack.c.l.b16 %v35
    %v116 = vunpack.c.l.b16 %v36
    %v117 = vunpack.c.l.b16 %v37
    %v118 = vunpack.c.l.b16 %v38
    %v119 = vunpack.c.l.b16 %v39
    %v120 = vunpack.c.l.b16 %v40
    %v121 = vunpack.c.l.b16 %v41
    %v122 = vunpack.c.l.b16 %v42
    %v123 = vunpack.c.l.b16 %v43
    %v124 = vunpack.c.l.b16 %v44
    %v125 = vpack.c.b16 %v94, %v93
    %v126 = vpack.c.b16 %v96, %v95
    %v127 = vpack.c.b16 %v98, %v97
    %v128 = vpack.c.b16 %v100, %v99
    %v129 = vpack.c.b16 %v102, %v101
    %v130 = vpack.c.b16 %v104, %v103
    %v131 = vpack.c.b16 %v106, %v105
    %v132 = vpack.c.b16 %v108, %v107
    %v133 = vpack.c.b16 %v110, %v109
    %v134 = vpack.c.b16 %v112, %v111
    %v135 = vpack.c.b16 %v114, %v113
    %v136 = vpack.c.b16 %v116, %v115
    %v137 = vpack.c.b16 %v118, %v117
    %v138 = vpack.c.b16 %v120, %v119
    %v139 = vpack.c.b16 %v122, %v121
    %v140 = vpack.c.b16 %v124, %v123
    %v173 = vunpack.c.l.b16 %v45
    %v174 = vunpack.c.h.b16 %v45
    %v175 = vunpack.c.l.b16 %v46
    %v176 = vunpack.c.h.b16 %v46
    %v177 = vunpack.c.l.b16 %v47
    %v178 = vunpack.c.h.b16 %v47
    %v179 = vunpack.c.l.b16 %v48
    %v180 = vunpack.c.h.b16 %v48
    %v181 = vunpack.c.l.b16 %v49
    %v182 = vunpack.c.h.b16 %v49
    %v183 = vunpack.c.l.b16 %v50
    %v184 = vunpack.c.h.b16 %v50
    %v185 = vunpack.c.l.b16 %v51
    %v186 = vunpack.c.h.b16 %v51
    %v187 = vunpack.c.l.b16 %v52
    %v188 = vunpack.c.h.b16 %v52
    %v189 = vunpack.c.l.b16 %v53
    %v190 = vunpack.c.h.b16 %v53
    %v191 = vunpack.c.l.b16 %v54
    %v192 = vunpack.c.h.b16 %v54
    %v193 = vunpack.c.l.b16 %v55
    %v194 = vunpack.c.h.b16 %v55
    %v195 = vunpack.c.l.b16 %v56
    %v196 = vunpack.c.h.b16 %v56
    %v197 = vunpack.c.l.b16 %v57
    %v198 = vunpack.c.h.b16 %v57
    %v199 = vunpack.c.l.b16 %v58
    %v200 = vunpack.c.h.b16 %v58
    %v201 = vunpack.c.l.b16 %v59
    %v202 = vunpack.c.h.b16 %v59
    %v203 = vunpack.c.l.b16 %v60
    %v204 = vunpack.c.h.b16 %v60
    %v205 = vpack.c.b16 %v175, %v173
    %v206 = vpack.c.b16 %v176, %v174
    %v207 = vpack.c.b16 %v179, %v177
    %v208 = vpack.c.b16 %v180, %v178
    %v209 = vpack.c.b16 %v183, %v181
    %v210 = vpack.c.b16 %v184, %v182
    %v211 = vpack.c.b16 %v187, %v185
    %v212 = vpack.c.b16 %v188, %v186
    %v213 = vpack.c.b16 %v191, %v189
    %v214 = vpack.c.b16 %v192, %v190
    %v215 = vpack.c.b16 %v195, %v193
    %v216 = vpack.c.b16 %v196, %v194
    %v217 = vpack.c.b16 %v199, %v197
    %v218 = vpack.c.b16 %v200, %v198
    %v219 = vpack.c.b16 %v203, %v201
    %v220 = vpack.c.b16 %v204, %v202
    %237 = vmatprep.subr.bf16.mxu0 %v206
    %238 = vmatpush1.bf16.msra.mxu0 %v205
    %239 = vmatprep.subr.bf16.mxu0 %v208
    %240 = vmatpush1.bf16.msra.mxu0 %v207
    %241 = vmatprep.subr.bf16.mxu0 %v210
    %242 = vmatpush1.bf16.msra.mxu0 %v209
    %243 = vmatprep.subr.bf16.mxu0 %v212
    %244 = vmatpush1.bf16.msra.mxu0 %v211
    %245 = vmatprep.subr.bf16.mxu0 %v214
    %246 = vmatpush1.bf16.msra.mxu0 %v213
    %247 = vmatprep.subr.bf16.mxu0 %v216
    %248 = vmatpush1.bf16.msra.mxu0 %v215
    %249 = vmatprep.subr.bf16.mxu0 %v218
    %250 = vmatpush1.bf16.msra.mxu0 %v217
    %251 = vmatprep.subr.bf16.mxu0 %v220
    %252 = vmatpush1.bf16.msra.mxu0 %v219
    %253 = vmatprep.subr.bf16.mxu0 0
    %254 = vmatpush1.bf16.msra.mxu0 0
    %255 = vmatprep.subr.bf16.mxu0 0
    %256 = vmatpush1.bf16.msra.mxu0 0
    %257 = vmatprep.subr.bf16.mxu0 0
    %258 = vmatpush1.bf16.msra.mxu0 0
    %259 = vmatprep.subr.bf16.mxu0 0
    %260 = vmatpush1.bf16.msra.mxu0 0
    %261 = vmatprep.subr.bf16.mxu0 0
    %262 = vmatpush1.bf16.msra.mxu0 0
    %263 = vmatprep.subr.bf16.mxu0 0
    %264 = vmatpush1.bf16.msra.mxu0 0
    %265 = vmatprep.subr.bf16.mxu0 0
    %266 = vmatpush1.bf16.msra.mxu0 0
    %267 = vmatprep.subr.bf16.mxu0 0
    %268 = vmatpush1.bf16.msra.mxu0 0
    %269 = vmatprep.mubr.bf16.mxu0 0
    %270 = vmatmul.mubr.bf16.gmra.mrb[0].mxu0 %v125
    %v271 = vpop.f32.mrb[0].mxu0
    %v272 = vadd.f32 0.0, %v271
    %v273 = vpop.f32.mrb[0].mxu0
    %v274 = vadd.f32 0.0, %v273
    %v275 = vpop.f32.mrb[0].mxu0
    %v276 = vadd.f32 0.0, %v275
    %v277 = vpop.f32.mrb[0].mxu0
    %v278 = vadd.f32 0.0, %v277
    %279 = vmatprep.mubr.bf16.mxu0 0
    %280 = vmatmul.mubr.bf16.gmra.mrb[0].mxu0 %v126
    %v281 = vpop.f32.mrb[0].mxu0
    %v282 = vadd.f32 0.0, %v281
    %v283 = vpop.f32.mrb[0].mxu0
    %v284 = vadd.f32 0.0, %v283
    %v285 = vpop.f32.mrb[0].mxu0
    %v286 = vadd.f32 0.0, %v285
    %v287 = vpop.f32.mrb[0].mxu0
    %v288 = vadd.f32 0.0, %v287
    %289 = vmatprep.mubr.bf16.mxu0 0
    %290 = vmatmul.mubr.bf16.gmra.mrb[0].mxu0 %v127
    %v291 = vpop.f32.mrb[0].mxu0
    %v292 = vadd.f32 0.0, %v291
    %v293 = vpop.f32.mrb[0].mxu0
    %v294 = vadd.f32 0.0, %v293
    %v295 = vpop.f32.mrb[0].mxu0
    %v296 = vadd.f32 0.0, %v295
    %v297 = vpop.f32.mrb[0].mxu0
    %v298 = vadd.f32 0.0, %v297
    %299 = vmatprep.mubr.bf16.mxu0 0
    %300 = vmatmul.mubr.bf16.gmra.mrb[0].mxu0 %v128
    %v301 = vpop.f32.mrb[0].mxu0
    %v302 = vadd.f32 0.0, %v301
    %v303 = vpop.f32.mrb[0].mxu0
    %v304 = vadd.f32 0.0, %v303
    %v305 = vpop.f32.mrb[0].mxu0
    %v306 = vadd.f32 0.0, %v305
    %v307 = vpop.f32.mrb[0].mxu0
    %v308 = vadd.f32 0.0, %v307
    %309 = vmatprep.mubr.bf16.mxu0 0
    %310 = vmatmul.mubr.bf16.gmra.mrb[0].mxu0 %v129
    %v311 = vpop.f32.mrb[0].mxu0
    %v312 = vadd.f32 0.0, %v311
    %v313 = vpop.f32.mrb[0].mxu0
    %v314 = vadd.f32 0.0, %v313
    %v315 = vpop.f32.mrb[0].mxu0
    %v316 = vadd.f32 0.0, %v315
    %v317 = vpop.f32.mrb[0].mxu0
    %v318 = vadd.f32 0.0, %v317
    %319 = vmatprep.mubr.bf16.mxu0 0
    %320 = vmatmul.mubr.bf16.gmra.mrb[0].mxu0 %v130
    %v321 = vpop.f32.mrb[0].mxu0
    %v322 = vadd.f32 0.0, %v321
    %v323 = vpop.f32.mrb[0].mxu0
    %v324 = vadd.f32 0.0, %v323
    %v325 = vpop.f32.mrb[0].mxu0
    %v326 = vadd.f32 0.0, %v325
    %v327 = vpop.f32.mrb[0].mxu0
    %v328 = vadd.f32 0.0, %v327
    %329 = vmatprep.mubr.bf16.mxu0 0
    %330 = vmatmul.mubr.bf16.gmra.mrb[0].mxu0 %v131
    %v331 = vpop.f32.mrb[0].mxu0
    %v332 = vadd.f32 0.0, %v331
    %v333 = vpop.f32.mrb[0].mxu0
    %v334 = vadd.f32 0.0, %v333
    %v335 = vpop.f32.mrb[0].mxu0
    %v336 = vadd.f32 0.0, %v335
    %v337 = vpop.f32.mrb[0].mxu0
    %v338 = vadd.f32 0.0, %v337
    %339 = vmatprep.mubr.bf16.mxu0 0
    %340 = vmatmul.mubr.bf16.gmra.mrb[0].mxu0 %v132
    %v341 = vpop.f32.mrb[0].mxu0
    %v342 = vadd.f32 0.0, %v341
    %v343 = vpop.f32.mrb[0].mxu0
    %v344 = vadd.f32 0.0, %v343
    %v345 = vpop.f32.mrb[0].mxu0
    %v346 = vadd.f32 0.0, %v345
    %v347 = vpop.f32.mrb[0].mxu0
    %v348 = vadd.f32 0.0, %v347
    %349 = vmatprep.mubr.bf16.mxu0 0
    %350 = vmatmul.mubr.bf16.gmra.mrb[0].mxu0 %v133
    %v351 = vpop.f32.mrb[0].mxu0
    %v352 = vadd.f32 0.0, %v351
    %v353 = vpop.f32.mrb[0].mxu0
    %v354 = vadd.f32 0.0, %v353
    %v355 = vpop.f32.mrb[0].mxu0
    %v356 = vadd.f32 0.0, %v355
    %v357 = vpop.f32.mrb[0].mxu0
    %v358 = vadd.f32 0.0, %v357
    %359 = vmatprep.mubr.bf16.mxu0 0
    %360 = vmatmul.mubr.bf16.gmra.mrb[0].mxu0 %v134
    %v361 = vpop.f32.mrb[0].mxu0
    %v362 = vadd.f32 0.0, %v361
    %v363 = vpop.f32.mrb[0].mxu0
    %v364 = vadd.f32 0.0, %v363
    %v365 = vpop.f32.mrb[0].mxu0
    %v366 = vadd.f32 0.0, %v365
    %v367 = vpop.f32.mrb[0].mxu0
    %v368 = vadd.f32 0.0, %v367
    %369 = vmatprep.mubr.bf16.mxu0 0
    %370 = vmatmul.mubr.bf16.gmra.mrb[0].mxu0 %v135
    %v371 = vpop.f32.mrb[0].mxu0
    %v372 = vadd.f32 0.0, %v371
    %v373 = vpop.f32.mrb[0].mxu0
    %v374 = vadd.f32 0.0, %v373
    %v375 = vpop.f32.mrb[0].mxu0
    %v376 = vadd.f32 0.0, %v375
    %v377 = vpop.f32.mrb[0].mxu0
    %v378 = vadd.f32 0.0, %v377
    %379 = vmatprep.mubr.bf16.mxu0 0
    %380 = vmatmul.mubr.bf16.gmra.mrb[0].mxu0 %v136
    %v381 = vpop.f32.mrb[0].mxu0
    %v382 = vadd.f32 0.0, %v381
    %v383 = vpop.f32.mrb[0].mxu0
    %v384 = vadd.f32 0.0, %v383
    %v385 = vpop.f32.mrb[0].mxu0
    %v386 = vadd.f32 0.0, %v385
    %v387 = vpop.f32.mrb[0].mxu0
    %v388 = vadd.f32 0.0, %v387
    %389 = vmatprep.mubr.bf16.mxu0 0
    %390 = vmatmul.mubr.bf16.gmra.mrb[0].mxu0 %v137
    %v391 = vpop.f32.mrb[0].mxu0
    %v392 = vadd.f32 0.0, %v391
    %v393 = vpop.f32.mrb[0].mxu0
    %v394 = vadd.f32 0.0, %v393
    %v395 = vpop.f32.mrb[0].mxu0
    %v396 = vadd.f32 0.0, %v395
    %v397 = vpop.f32.mrb[0].mxu0
    %v398 = vadd.f32 0.0, %v397
    %399 = vmatprep.mubr.bf16.mxu0 0
    %400 = vmatmul.mubr.bf16.gmra.mrb[0].mxu0 %v138
    %v401 = vpop.f32.mrb[0].mxu0
    %v402 = vadd.f32 0.0, %v401
    %v403 = vpop.f32.mrb[0].mxu0
    %v404 = vadd.f32 0.0, %v403
    %v405 = vpop.f32.mrb[0].mxu0
    %v406 = vadd.f32 0.0, %v405
    %v407 = vpop.f32.mrb[0].mxu0
    %v408 = vadd.f32 0.0, %v407
    %409 = vmatprep.mubr.bf16.mxu0 0
    %410 = vmatmul.mubr.bf16.gmra.mrb[0].mxu0 %v139
    %v411 = vpop.f32.mrb[0].mxu0
    %v412 = vadd.f32 0.0, %v411
    %v413 = vpop.f32.mrb[0].mxu0
    %v414 = vadd.f32 0.0, %v413
    %v415 = vpop.f32.mrb[0].mxu0
    %v416 = vadd.f32 0.0, %v415
    %v417 = vpop.f32.mrb[0].mxu0
    %v418 = vadd.f32 0.0, %v417
    %419 = vmatprep.mubr.bf16.mxu0 0
    %420 = vmatmul.mubr.bf16.gmra.mrb[0].mxu0 %v140
    %v421 = vpop.f32.mrb[0].mxu0
    %v422 = vadd.f32 0.0, %v421
    %v423 = vpop.f32.mrb[0].mxu0
    %v424 = vadd.f32 0.0, %v423
    %v425 = vpop.f32.mrb[0].mxu0
    %v426 = vadd.f32 0.0, %v425
    %v427 = vpop.f32.mrb[0].mxu0
    %v428 = vadd.f32 0.0, %v427
    %429 = vdwg.mxu0
    %430 = vst [vmem:[#allocation2] sm:$0xff] %v272
    %431 = vst [vmem:[#allocation2 + $0x8] sm:$0xff] %v274
    %432 = vst [vmem:[#allocation2 + $0x10] sm:$0xff] %v276
    %433 = vst [vmem:[#allocation2 + $0x18] sm:$0xff] %v278
    %434 = vst [vmem:[#allocation2 + $0x20] sm:$0xff] %v282
    %435 = vst [vmem:[#allocation2 + $0x28] sm:$0xff] %v284
    %436 = vst [vmem:[#allocation2 + $0x30] sm:$0xff] %v286
    %437 = vst [vmem:[#allocation2 + $0x38] sm:$0xff] %v288
    %438 = vst [vmem:[#allocation2 + $0x40] sm:$0xff] %v292
    %439 = vst [vmem:[#allocation2 + $0x48] sm:$0xff] %v294
    %440 = vst [vmem:[#allocation2 + $0x50] sm:$0xff] %v296
    %441 = vst [vmem:[#allocation2 + $0x58] sm:$0xff] %v298
    %442 = vst [vmem:[#allocation2 + $0x60] sm:$0xff] %v302
    %443 = vst [vmem:[#allocation2 + $0x68] sm:$0xff] %v304
    %444 = vst [vmem:[#allocation2 + $0x70] sm:$0xff] %v306
    %445 = vst [vmem:[#allocation2 + $0x78] sm:$0xff] %v308
    %446 = vst [vmem:[#allocation2 + $0x80] sm:$0xff] %v312
    %447 = vst [vmem:[#allocation2 + $0x88] sm:$0xff] %v314
    %448 = vst [vmem:[#allocation2 + $0x90] sm:$0xff] %v316
    %449 = vst [vmem:[#allocation2 + $0x98] sm:$0xff] %v318
    %450 = vst [vmem:[#allocation2 + $0xa0] sm:$0xff] %v322
    %451 = vst [vmem:[#allocation2 + $0xa8] sm:$0xff] %v324
    %452 = vst [vmem:[#allocation2 + $0xb0] sm:$0xff] %v326
    %453 = vst [vmem:[#allocation2 + $0xb8] sm:$0xff] %v328
    %454 = vst [vmem:[#allocation2 + $0xc0] sm:$0xff] %v332
    %455 = vst [vmem:[#allocation2 + $0xc8] sm:$0xff] %v334
    %456 = vst [vmem:[#allocation2 + $0xd0] sm:$0xff] %v336
    %457 = vst [vmem:[#allocation2 + $0xd8] sm:$0xff] %v338
    %458 = vst [vmem:[#allocation2 + $0xe0] sm:$0xff] %v342
    %459 = vst [vmem:[#allocation2 + $0xe8] sm:$0xff] %v344
    %460 = vst [vmem:[#allocation2 + $0xf0] sm:$0xff] %v346
    %461 = vst [vmem:[#allocation2 + $0xf8] sm:$0xff] %v348
    %462 = vst [vmem:[#allocation2 + $0x100] sm:$0xff] %v352
    %463 = vst [vmem:[#allocation2 + $0x108] sm:$0xff] %v354
    %464 = vst [vmem:[#allocation2 + $0x110] sm:$0xff] %v356
    %465 = vst [vmem:[#allocation2 + $0x118] sm:$0xff] %v358
    %466 = vst [vmem:[#allocation2 + $0x120] sm:$0xff] %v362
    %467 = vst [vmem:[#allocation2 + $0x128] sm:$0xff] %v364
    %468 = vst [vmem:[#allocation2 + $0x130] sm:$0xff] %v366
    %469 = vst [vmem:[#allocation2 + $0x138] sm:$0xff] %v368
    %470 = vst [vmem:[#allocation2 + $0x140] sm:$0xff] %v372
    %471 = vst [vmem:[#allocation2 + $0x148] sm:$0xff] %v374
    %472 = vst [vmem:[#allocation2 + $0x150] sm:$0xff] %v376
    %473 = vst [vmem:[#allocation2 + $0x158] sm:$0xff] %v378
    %474 = vst [vmem:[#allocation2 + $0x160] sm:$0xff] %v382
    %475 = vst [vmem:[#allocation2 + $0x168] sm:$0xff] %v384
    %476 = vst [vmem:[#allocation2 + $0x170] sm:$0xff] %v386
    %477 = vst [vmem:[#allocation2 + $0x178] sm:$0xff] %v388
    %478 = vst [vmem:[#allocation2 + $0x180] sm:$0xff] %v392
    %479 = vst [vmem:[#allocation2 + $0x188] sm:$0xff] %v394
    %480 = vst [vmem:[#allocation2 + $0x190] sm:$0xff] %v396
    %481 = vst [vmem:[#allocation2 + $0x198] sm:$0xff] %v398
    %482 = vst [vmem:[#allocation2 + $0x1a0] sm:$0xff] %v402
    %483 = vst [vmem:[#allocation2 + $0x1a8] sm:$0xff] %v404
    %484 = vst [vmem:[#allocation2 + $0x1b0] sm:$0xff] %v406
    %485 = vst [vmem:[#allocation2 + $0x1b8] sm:$0xff] %v408
    %486 = vst [vmem:[#allocation2 + $0x1c0] sm:$0xff] %v412
    %487 = vst [vmem:[#allocation2 + $0x1c8] sm:$0xff] %v414
    %488 = vst [vmem:[#allocation2 + $0x1d0] sm:$0xff] %v416
    %489 = vst [vmem:[#allocation2 + $0x1d8] sm:$0xff] %v418
    %490 = vst [vmem:[#allocation2 + $0x1e0] sm:$0xff] %v422
    %491 = vst [vmem:[#allocation2 + $0x1e8] sm:$0xff] %v424
    %492 = vst [vmem:[#allocation2 + $0x1f0] sm:$0xff] %v426
    %493 = vst [vmem:[#allocation2 + $0x1f8] sm:$0xff] %v428
    // Predicated region
    $region10: #{linear_forward_pretransposed.1} parent=1 // pred_check
      _
    $region11: #{linear_forward_pretransposed.1} parent=1 // pred_check_branch
      %495 = sbr.rel (0) target = $region13
    $region12: #{linear_forward_pretransposed.1} parent=1 // pred_region
      %s497 = ssub.s32 8192, 8192
      %498 = vsyncadd [#allocation3], %s497
      %s499 = sshll.u32 [#allocation2], 4
      %s500 = int_to_ptr.vmem [resolvable:$true] %s499
      %505 = dma.vmem_to_hbm [thread:$0]  %s500, 8192, %s2, [#allocation3], 256, 256, 16
    $region13: #{linear_forward_pretransposed.1} parent=1 // pred_fallthru
      _
    // Predicated region
    $region14: #{linear_forward_pretransposed.1} parent=1 // pred_check
      _
    $region15: #{linear_forward_pretransposed.1} parent=1 // pred_check_branch
      %507 = sbr.rel (0) target = $region17
    $region16: #{linear_forward_pretransposed.1} parent=1 // pred_region
      %508 = dma.done [#allocation3], 8192
    $region17: #{linear_forward_pretransposed.1} parent=1 // pred_fallthru
      _
    %509 = vsyncpa [#allocation3], 1

</llo_original>
